<compile_context>
chip_gen: v5e
topology: v5e:2x2
jax: 0.10.0
libtpu: 0.0.40
codegen_flags: <defaults>
</compile_context>

<pallas_src>
import jax
import jax.numpy as jnp
from jax.experimental import pallas as pl
from jax.experimental.pallas import tpu as pltpu


# --------------------------------------------------------------------------
# Kernels
# --------------------------------------------------------------------------
def _passthrough_kernel(x_ref, o_ref):
    # Output buffer is aliased to the input buffer (input_output_aliases);
    # the data is already where it needs to be.  Just pin a fake read/write
    # dependency on the aliased output so it materializes correctly.
    del x_ref
    pltpu.touch(o_ref)


def _copy_kernel(x_ref, o_ref):
    # Plain VMEM tile copy; all the work is the (pipelined) HBM<->VMEM DMA.
    o_ref[...] = x_ref[...]


# --------------------------------------------------------------------------
# Helpers
# --------------------------------------------------------------------------
def _sublane_multiple(dtype) -> int:
    itemsize = jnp.dtype(dtype).itemsize
    return {4: 8, 2: 16, 1: 32}.get(itemsize, 8)


def _lane_width(total: int, max_lanes: int = 2048) -> int:
    """Widest power-of-two multiple of 128 (<= max_lanes) dividing `total`."""
    best = 0
    cand = 128
    while cand <= max_lanes:
        if total % cand == 0:
            best = cand
        cand *= 2
    return best


# --------------------------------------------------------------------------
# Tiled-copy path (used when an explicit materializing copy is requested,
# or as a fallback if the aliased pass-through cannot be lowered).
# --------------------------------------------------------------------------
def _flatten_copy(x2: jax.Array) -> jax.Array:
    N, C = x2.shape
    total = N * C
    itemsize = jnp.dtype(x2.dtype).itemsize

    # Lane-densify whenever the flat buffer tiles into full 128-lane rows,
    # choosing the widest lane dim available for long unmasked stores and
    # long contiguous DMA runs.
    L = _lane_width(total)
    if L:
        view = jnp.reshape(x2, (total // L, L))  # metadata-only reshape
    else:
        view = x2
    R, L = view.shape

    # Row tile driven by an ~8 MiB per-block byte budget (no artificial row
    # cap).  Double-buffered in+out footprint <= 32 MiB, within the 48 MiB
    # scoped-VMEM limit requested below on every generation (incl. v7x).
    sub = _sublane_multiple(view.dtype)
    max_block_bytes = 8 * 1024 * 1024
    rows_budget = max(1, max_block_bytes // max(1, L * itemsize))
    if R <= rows_budget or R <= sub:
        tile_r = R  # single full block along rows (block == full dim is legal)
    else:
        tile_r = max(sub, (rows_budget // sub) * sub)

    grid = (pl.cdiv(R, tile_r),)

    out2d = pl.pallas_call(
        _copy_kernel,
        out_shape=jax.ShapeDtypeStruct((R, L), view.dtype),
        grid=grid,
        in_specs=[pl.BlockSpec((tile_r, L), lambda i: (i, 0))],
        out_specs=pl.BlockSpec((tile_r, L), lambda i: (i, 0)),
        compiler_params=pltpu.CompilerParams(
            dimension_semantics=("parallel",),
            vmem_limit_bytes=48 * 1024 * 1024,
        ),
        cost_estimate=pl.CostEstimate(
            flops=0,
            transcendentals=0,
            bytes_accessed=2 * total * itemsize,
        ),
    )(view)

    return jnp.reshape(out2d, (N, C))


# --------------------------------------------------------------------------
# Public wrapper
# --------------------------------------------------------------------------
def flatten(x: jax.Array, *, force_copy: bool = False) -> jax.Array:
    """Pallas equivalent of Flatten.forward: (N, C, 1, 1) -> (N, C)."""
    assert x.ndim == 4, f"expected NCHW input, got shape {x.shape}"
    N, C, H, W = x.shape
    assert H == 1 and W == 1, f"{H} != {W} != 1"

    # Squeeze trailing singleton dims in the wrapper (metadata-only reshape)
    # so the kernel sees a 2-D array with channels on the lane axis.
    x2 = jnp.reshape(x, (N, C))

    if force_copy:
        return _flatten_copy(x2)

    # Zero-copy pass-through: raw HBM refs on both sides, output aliased to
    # the input -> no HBM read, no HBM write, no VMEM staging.
    try:
        return pl.pallas_call(
            _passthrough_kernel,
            out_shape=jax.ShapeDtypeStruct((N, C), x.dtype),
            in_specs=[pl.BlockSpec(memory_space=pl.ANY)],
            out_specs=pl.BlockSpec(memory_space=pl.ANY),
            input_output_aliases={0: 0},
        )(x2)
    except Exception:
        # Defensive fallback: if the aliased no-op path cannot be lowered on
        # this backend/version, fall back to the tiled, lane-dense copy.
        return _flatten_copy(x2)


# --------------------------------------------------------------------------
# Self-test
# --------------------------------------------------------------------------
if __name__ == "__main__":
    key = jax.random.PRNGKey(0)

    # Small NCHW input consistent with the module's assertion (H == W == 1).
    x_small = jax.random.normal(key, (2, 4, 1, 1), dtype=jnp.float32)
    out_small = flatten(x_small)
    jax.block_until_ready(out_small)
    ref_small = x_small[:, :, 0, 0]
    assert out_small.shape == (2, 4), out_small.shape
    assert out_small.dtype == x_small.dtype, out_small.dtype
    assert jnp.array_equal(out_small, ref_small), "mismatch vs reference (small)"

    # Larger case: zero-copy path and explicit lane-densified copy path.
    x_big = jax.random.normal(key, (256, 128, 1, 1), dtype=jnp.float32)
    ref_big = x_big[:, :, 0, 0]
    out_alias = flatten(x_big)
    out_copy = flatten(x_big, force_copy=True)
    jax.block_until_ready((out_alias, out_copy))
    assert out_alias.shape == (256, 128), out_alias.shape
    assert jnp.array_equal(out_alias, ref_big), "mismatch vs reference (alias)"
    assert jnp.array_equal(out_copy, ref_big), "mismatch vs reference (copy)"

    # Odd, non-128-divisible shape exercises the full-dim (masked) block path.
    x_odd = jax.random.normal(key, (3, 5, 1, 1), dtype=jnp.bfloat16)
    out_odd = flatten(x_odd, force_copy=True)
    jax.block_until_ready(out_odd)
    assert jnp.array_equal(out_odd, x_odd[:, :, 0, 0]), "mismatch vs reference (odd)"

    print("KERNEL_OK")
</pallas_src>

<mosaic_0001>
module attributes {stable_mosaic.version = 11 : i64} {
  func.func @_passthrough_kernel(%arg0: memref<2x4xf32, #tpu.memory_space<any>>, %arg1: memref<2x4xf32, #tpu.memory_space<any>>) attributes {dimension_semantics = [], scalar_prefetch = 0 : i64, scratch_operands = 0 : i64, tpu.core_type = #tpu.core_type<tc>} {
    return
  }
}

module attributes {stable_mosaic.version = 11 : i64} {
  func.func @_copy_kernel(%arg0: i32, %arg1: memref<2x4xf32, #tpu.memory_space<vmem>>, %arg2: memref<2x4xf32, #tpu.memory_space<vmem>>) attributes {dimension_semantics = [#tpu.dimension_semantics<parallel>], iteration_bounds = array<i64: 1>, scalar_prefetch = 0 : i64, scratch_operands = 0 : i64, tpu.core_type = #tpu.core_type<tc>, window_params = [{transform_indices = @transform_0, window_bounds = array<i64: 2, 4>}, {transform_indices = @transform_1, window_bounds = array<i64: 2, 4>}]} {
    %c0 = arith.constant 0 : index
    %c0_0 = arith.constant 0 : index
    %0 = vector.load %arg1[%c0, %c0_0] : memref<2x4xf32, #tpu.memory_space<vmem>>, vector<2x4xf32>
    %c0_1 = arith.constant 0 : index
    %c0_2 = arith.constant 0 : index
    %1 = vector.load %arg2[%c0_1, %c0_2] : memref<2x4xf32, #tpu.memory_space<vmem>>, vector<2x4xf32>
    tpu.vector_store %arg2[%c0_1, %c0_2], %0 {strides = array<i32>} : memref<2x4xf32, #tpu.memory_space<vmem>>, vector<2x4xf32>,
    return
  }
  func.func @transform_0(%arg0: i32) -> (i32, i32) {
    %c0_i32 = arith.constant 0 : i32
    %c0_i32_0 = arith.constant 0 : i32
    return %arg0, %c0_i32 : i32, i32
  }
  func.func @transform_1(%arg0: i32) -> (i32, i32) {
    %c0_i32 = arith.constant 0 : i32
    %c0_i32_0 = arith.constant 0 : i32
    return %arg0, %c0_i32 : i32, i32
  }
}

</mosaic_0001>

<llo_original>
// kernel: tpu_custom_call.1
$region0: #{tpu_custom_call.1}
  #allocation0 [shape = 'u32[]', space=smem, size = 0x4, offset = 0x4, fixed_abs, tag = 'smem constant byte address 0x4 - core index']
  #allocation1 [shape = 'u32[72,128]{1,0:T(1,128)}', space=vmem, size = 0x9000, scoped, tag = 'internal scratch']
  %s0 = inlined_call_operand.hbm [shape: f32[2,4], index: 0, kind: input, shape index: {}, may-alias: {0,1}]
  %s1 = inlined_call_operand.hbm [shape: f32[2,4], index: 1, kind: output, shape index: {}, may-alias: {0,1}]
  %s2 = sld [smem:[#allocation0]]
  $region2: #{tpu_custom_call.1} parent=0
    _
  %s4 = ssub.s32 1, %s2
  %s5 = scalar_select 0, %s4, %s2

// kernel: tpu_custom_call.1
$region0: #{tpu_custom_call.1}
  #allocation0 [shape = 'u32[]', space=smem, size = 0x4, offset = 0x4, fixed_abs, tag = 'smem constant byte address 0x4 - core index']
  #allocation1 [shape = 'u32[72,128]{1,0:T(1,128)}', space=vmem, size = 0x9000, scoped, tag = 'internal scratch']
  %s0 = inlined_call_operand.hbm [shape: f32[2,4], index: 0, kind: input, shape index: {}]
  %s1 = inlined_call_operand.hbm [shape: f32[2,4], index: 1, kind: output, shape index: {}]
  %s2 = sld [smem:[#allocation0]]
  $region18: #{tpu_custom_call.1} parent=0
    _
  %s4 = ssub.s32 1, %s2
  %s5 = scalar_select 0, %s4, %s2
  $region1: #{tpu_custom_call.1} parent=0
    #allocation2 [shape = 'u8[1024]{0}', space=vmem, size = 0x400, scoped, tag = 'input window, operand 0, single buffered']
    #allocation3 [shape = 's32[1]{0}', space=sflag, size = 0x4, scoped, tag = 'scoped memory for tpu_custom_call.1']
    #allocation4 [shape = 's32[1]{0}', space=sflag, size = 0x4, scoped, tag = 'scoped memory for tpu_custom_call.1']
    #allocation5 [shape = 'u8[1024]{0}', space=vmem, size = 0x400, scoped, tag = 'output window, operand 0, single buffered']
    %6 = vsyncpa [#allocation3], 0
    %7 = vsyncpa [#allocation4], 0
    // Predicated region
    $region2: #{tpu_custom_call.1} parent=1 // pred_check
      _
    $region3: #{tpu_custom_call.1} parent=1 // pred_check_branch
      %9 = sbr.rel (0) target = $region5
    $region4: #{tpu_custom_call.1} parent=1 // pred_region
      %11 = vsyncadd [#allocation3], 0
      %s13 = sshll.u32 %s0, 4
      %s14 = int_to_ptr.hbm [resolvable:$true] %s13
      %s15 = sshll.u32 [#allocation2], 4
      %s16 = int_to_ptr.vmem [resolvable:$true] %s15
      %18 = dma.hbm_to_vmem [thread:$0]  %s14, 32, %s16, [#allocation3]
    $region5: #{tpu_custom_call.1} parent=1 // pred_fallthru
      _
    // Predicated region
    $region6: #{tpu_custom_call.1} parent=1 // pred_check
      _
    $region7: #{tpu_custom_call.1} parent=1 // pred_check_branch
      %20 = sbr.rel (0) target = $region9
    $region8: #{tpu_custom_call.1} parent=1 // pred_region
      %22 = dma.done [#allocation3], 32
    $region9: #{tpu_custom_call.1} parent=1 // pred_fallthru
      _
    %v23 = vld [vmem:[#allocation2] sm:$0x3]
    %vm24 = vcmask 25600
    %25 = vst.msk [vmem:[#allocation5] sm:$0x3] %vm24, %v23
    // Predicated region
    $region10: #{tpu_custom_call.1} parent=1 // pred_check
      _
    $region11: #{tpu_custom_call.1} parent=1 // pred_check_branch
      %27 = sbr.rel (0) target = $region13
    $region12: #{tpu_custom_call.1} parent=1 // pred_region
      %29 = vsyncadd [#allocation4], 0
      %s31 = sshll.u32 [#allocation5], 4
      %s32 = int_to_ptr.vmem [resolvable:$true] %s31
      %s33 = sshll.u32 %s1, 4
      %s34 = int_to_ptr.hbm [resolvable:$true] %s33
      %36 = dma.vmem_to_hbm [thread:$0]  %s32, 32, %s34, [#allocation4]
    $region13: #{tpu_custom_call.1} parent=1 // pred_fallthru
      _
    // Predicated region
    $region14: #{tpu_custom_call.1} parent=1 // pred_check
      _
    $region15: #{tpu_custom_call.1} parent=1 // pred_check_branch
      %38 = sbr.rel (0) target = $region17
    $region16: #{tpu_custom_call.1} parent=1 // pred_region
      %40 = dma.done [#allocation4], 32
    $region17: #{tpu_custom_call.1} parent=1 // pred_fallthru
      _
    %41 = vsyncpa [#allocation3], 1
    %42 = vsyncpa [#allocation4], 1

</llo_original>
